<compile_context>
chip_gen: v7x
topology: tpu7x:2x2x1
jax: 0.10.0
libtpu: 0.0.40
codegen_flags: <defaults>
</compile_context>

<pallas_src>
import functools
import math

import jax
import jax.numpy as jnp
from jax.experimental import pallas as pl
from jax.experimental.pallas import tpu as pltpu

_INV_SQRT2 = 1.0 / math.sqrt(2.0)


def _ff_kernel(x_ref, w1_ref, b1_ref, w2_ref, b2_ref, o_ref, acc_ref, *,
               compute_dtype):
    # x_ref:   (tm, dim)       row tile of flattened tokens (original dtype)
    # w1_ref:  (dim, tk)       compute_dtype slice of first linear weight (in, out)
    # b1_ref:  (1, tk)         f32
    # w2_ref:  (tk, dim_out)   compute_dtype slice of second linear weight (in, out)
    # b2_ref:  (1, dim_out)    f32
    # o_ref:   (tm, dim_out)
    # acc_ref: (tm, dim_out)   f32 accumulator, persists across the K axis
    k = pl.program_id(1)

    @pl.when(k == 0)
    def _():
        acc_ref[...] = jnp.zeros_like(acc_ref)

    x = x_ref[...].astype(compute_dtype)
    h = jnp.dot(x, w1_ref[...], preferred_element_type=jnp.float32)
    h = h + b1_ref[...]
    # exact (erf-based) GELU, matching torch.nn.GELU() default
    g = 0.5 * h * (1.0 + jax.lax.erf(h * _INV_SQRT2))
    # Dropout(p=0.0) -> identity
    acc_ref[...] += jnp.dot(g.astype(w2_ref.dtype), w2_ref[...],
                            preferred_element_type=jnp.float32)

    @pl.when(k == pl.num_programs(1) - 1)
    def _():
        o_ref[...] = (acc_ref[...] + b2_ref[...]).astype(o_ref.dtype)


def _round_up(x, m):
    return (x + m - 1) // m * m


def _vmem_bytes(dim, dim_out, tm, tk, n_k, x_bytes, c_bytes, o_bytes):
    """Rough per-step VMEM working-set estimate for the chosen tiling."""
    wbuf = 1 if n_k == 1 else 2        # resident weights are single-buffered
    b = 2 * tm * dim * x_bytes         # x tile (double-buffered)
    b += tm * dim * c_bytes            # in-kernel cast copy of x
    b += wbuf * dim * tk * c_bytes     # w1 slice
    b += wbuf * tk * 4                 # b1 slice (f32)
    b += wbuf * tk * dim_out * c_bytes # w2 slice
    b += dim_out * 4                   # b2 (single-buffered)
    b += 2 * tm * dim_out * o_bytes    # out tile (double-buffered)
    b += tm * dim_out * 4              # f32 accumulator scratch
    b += 2 * tm * tk * 4               # h / gelu f32 working set
    return b


def _pick_tk(dim, inner, dim_out, tm, x_bytes, c_bytes, o_bytes, budget):
    """Largest K tile (full inner, or a lane-aligned divisor of inner) under budget."""
    cands = {inner}
    if inner % 128 == 0:
        for tk in range(128, inner + 1, 128):
            if inner % tk == 0:
                cands.add(tk)
    for tk in sorted(cands, reverse=True):
        if _vmem_bytes(dim, dim_out, tm, tk, inner // tk,
                       x_bytes, c_bytes, o_bytes) <= budget:
            return tk
    return min(cands)


def feed_forward(x, w1, b1, w2, b2, *, tm=256, compute_dtype=jnp.bfloat16,
                 vmem_budget_bytes=36 * 1024 * 1024):
    """x: (B, S, dim); w1: (dim, inner); b1: (inner,); w2: (inner, dim_out); b2: (dim_out,).

    Weights are laid out (in, out), i.e. transposed vs. torch nn.Linear.weight.
    """
    B, S, dim = x.shape
    inner = w1.shape[1]
    dim_out = w2.shape[1]
    out_dtype = x.dtype

    rows = B * S
    x_bytes = jnp.dtype(x.dtype).itemsize
    c_bytes = jnp.dtype(compute_dtype).itemsize
    o_bytes = jnp.dtype(out_dtype).itemsize

    # Row tile: multiple of 8 sublanes, capped by the (rounded-up) token count so
    # tiny inputs don't pay for a huge padded tile. rows % tm != 0 is fine: the
    # partial last block is masked on store by Pallas (no wrapper-side padding).
    tm = max(8, min(_round_up(tm, 8), _round_up(rows, 8)))

    # K (inner) tile: largest lane-aligned slice that keeps VMEM under budget.
    tk = _pick_tk(dim, inner, dim_out, tm, x_bytes, c_bytes, o_bytes,
                  vmem_budget_bytes)
    n_k = inner // tk
    resident = (n_k == 1)

    x2 = x.reshape(rows, dim)                       # leading-dim merge: no copy

    w1c = w1.astype(compute_dtype)
    w2c = w2.astype(compute_dtype)
    b1_2d = b1.reshape(1, inner).astype(jnp.float32)
    b2_2d = b2.reshape(1, dim_out).astype(jnp.float32)

    single = dict(pipeline_mode=pl.Buffered(1))     # constant index -> 1 buffer
    w_mode = single if resident else {}             # streamed slices keep 2 buffers

    grid = (pl.cdiv(rows, tm), n_k)

    cost = pl.CostEstimate(
        flops=2 * rows * dim * inner + 2 * rows * inner * dim_out,
        transcendentals=rows * inner,
        bytes_accessed=(rows * dim * x_bytes
                        + rows * dim_out * o_bytes
                        + dim * inner * c_bytes + inner * dim_out * c_bytes
                        + 4 * (inner + dim_out)),
    )

    vmem_need = _vmem_bytes(dim, dim_out, tm, tk, n_k, x_bytes, c_bytes, o_bytes)
    vmem_limit = int(min(max(vmem_need + (8 << 20), 32 << 20), 48 << 20))

    out = pl.pallas_call(
        functools.partial(_ff_kernel, compute_dtype=compute_dtype),
        out_shape=jax.ShapeDtypeStruct((rows, dim_out), out_dtype),
        grid_spec=pltpu.PrefetchScalarGridSpec(
            num_scalar_prefetch=0,
            grid=grid,
            in_specs=[
                pl.BlockSpec((tm, dim), lambda i, k: (i, 0)),                 # x rows
                pl.BlockSpec((dim, tk), lambda i, k: (0, k), **w_mode),       # w1 slice
                pl.BlockSpec((1, tk), lambda i, k: (0, k), **w_mode),         # b1 slice
                pl.BlockSpec((tk, dim_out), lambda i, k: (k, 0), **w_mode),   # w2 slice
                pl.BlockSpec((1, dim_out), lambda i, k: (0, 0), **single),    # b2
            ],
            # NOTE: for narrow dim_out (<128) stores are masked; real LDM dims
            # (>=320) are lane-dense so this is fine in production configs.
            out_specs=pl.BlockSpec((tm, dim_out), lambda i, k: (i, 0)),
            scratch_shapes=[pltpu.VMEM((tm, dim_out), jnp.float32)],
        ),
        compiler_params=pltpu.CompilerParams(
            dimension_semantics=("parallel", "arbitrary"),
            vmem_limit_bytes=vmem_limit),
        cost_estimate=cost,
    )(x2, w1c, b1_2d, w2c, b2_2d)

    return out.reshape(B, S, dim_out)


def _reference(x, w1, b1, w2, b2):
    h = jnp.einsum("bsd,di->bsi", x, w1) + b1
    g = jax.nn.gelu(h, approximate=False)
    return jnp.einsum("bsi,io->bso", g, w2) + b2


if __name__ == "__main__":
    # FeedForward(dim=32, mult=4, glu=False, dropout=0.0) -> inner_dim=128, dim_out=32
    # TODO(synk): glu=True (GEGLU) branch of the module is not implemented here.
    B, S, dim, mult = 2, 8, 32, 4
    inner = dim * mult
    dim_out = dim

    key = jax.random.PRNGKey(0)
    kx, k1, kb1, k2, kb2 = jax.random.split(key, 5)

    x = jax.random.normal(kx, (B, S, dim), dtype=jnp.float32)

    # deterministic synthetic params; stored as (in, out), transposed vs torch nn.Linear
    w1 = jax.random.normal(k1, (dim, inner), dtype=jnp.float32) * (1.0 / math.sqrt(dim))
    b1 = jax.random.normal(kb1, (inner,), dtype=jnp.float32) * 0.01
    w2 = jax.random.normal(k2, (inner, dim_out), dtype=jnp.float32) * (1.0 / math.sqrt(inner))
    b2 = jax.random.normal(kb2, (dim_out,), dtype=jnp.float32) * 0.01

    y = feed_forward(x, w1, b1, w2, b2)
    y = jax.block_until_ready(y)

    y_ref = _reference(x, w1, b1, w2, b2)
    assert y.shape == (B, S, dim_out)
    # bf16 inputs on the MXU (f32 accumulation) vs f32 reference -> loosened tolerance.
    assert jnp.allclose(y, y_ref, atol=5e-2, rtol=5e-2), "mismatch vs reference"

    print("KERNEL_OK")
</pallas_src>

<mosaic_0001>
module attributes {stable_mosaic.version = 11 : i64} {
  func.func @_ff_kernel(%arg0: i32, %arg1: i32, %arg2: memref<16x32xf32, #tpu.memory_space<vmem>>, %arg3: memref<32x128xbf16, #tpu.memory_space<vmem>>, %arg4: memref<1x128xf32, #tpu.memory_space<vmem>>, %arg5: memref<128x32xbf16, #tpu.memory_space<vmem>>, %arg6: memref<1x32xf32, #tpu.memory_space<vmem>>, %arg7: memref<16x32xf32, #tpu.memory_space<vmem>>, %arg8: memref<16x32xf32, #tpu.memory_space<vmem>>) attributes {dimension_semantics = [#tpu.dimension_semantics<parallel>, #tpu.dimension_semantics<arbitrary>], iteration_bounds = array<i64: 1, 1>, scalar_prefetch = 0 : i64, scratch_operands = 1 : i64, tpu.core_type = #tpu.core_type<tc>, window_params = [{transform_indices = @transform_0, window_bounds = array<i64: 16, 32>}, {pipeline_mode = #tpu.pipeline_mode<synchronous>, transform_indices = @transform_1, window_bounds = array<i64: 32, 128>}, {pipeline_mode = #tpu.pipeline_mode<synchronous>, transform_indices = @transform_2, window_bounds = array<i64: 1, 128>}, {pipeline_mode = #tpu.pipeline_mode<synchronous>, transform_indices = @transform_3, window_bounds = array<i64: 128, 32>}, {pipeline_mode = #tpu.pipeline_mode<synchronous>, transform_indices = @transform_4, window_bounds = array<i64: 1, 32>}, {transform_indices = @transform_5, window_bounds = array<i64: 16, 32>}]} {
    %c0_i32 = arith.constant 0 : i32
    %0 = arith.cmpi eq, %arg1, %c0_i32 : i32
    %1 = arith.extui %0 : i1 to i32
    %c0_i32_0 = arith.constant 0 : i32
    %2 = arith.cmpi ne, %1, %c0_i32_0 : i32
    scf.if %2 {
      %cst_18 = arith.constant 0.000000e+00 : f32
      %27 = vector.broadcast %cst_18 : f32 to vector<16x32xf32>
      %c0_19 = arith.constant 0 : index
      %c0_20 = arith.constant 0 : index
      %28 = vector.load %arg8[%c0_19, %c0_20] : memref<16x32xf32, #tpu.memory_space<vmem>>, vector<16x32xf32>
      tpu.vector_store %arg8[%c0_19, %c0_20], %27 {strides = array<i32>} : memref<16x32xf32, #tpu.memory_space<vmem>>, vector<16x32xf32>,
    } else {
    }
    %c0 = arith.constant 0 : index
    %c0_1 = arith.constant 0 : index
    %3 = vector.load %arg2[%c0, %c0_1] : memref<16x32xf32, #tpu.memory_space<vmem>>, vector<16x32xf32>
    %4 = arith.truncf %3 : vector<16x32xf32> to vector<16x32xbf16>
    %c0_2 = arith.constant 0 : index
    %c0_3 = arith.constant 0 : index
    %5 = vector.load %arg3[%c0_2, %c0_3] : memref<32x128xbf16, #tpu.memory_space<vmem>>, vector<32x128xbf16>
    %cst = arith.constant dense<0.000000e+00> : vector<16x128xf32>
    %6 = tpu.matmul %4, %5, %cst {dimension_numbers = #tpu.dot_dimension_numbers<[1], [0], [0], [1], [0, 0, 1, 1], [], []>} : vector<16x32xbf16>, vector<32x128xbf16>, vector<16x128xf32> -> vector<16x128xf32>
    %c0_4 = arith.constant 0 : index
    %c0_5 = arith.constant 0 : index
    %7 = vector.load %arg4[%c0_4, %c0_5] : memref<1x128xf32, #tpu.memory_space<vmem>>, vector<1x128xf32>
    %8 = vector.broadcast %7 : vector<1x128xf32> to vector<16x128xf32>
    %9 = arith.addf %6, %8 : vector<16x128xf32>
    %cst_6 = arith.constant 5.000000e-01 : f32
    %10 = vector.broadcast %cst_6 : f32 to vector<16x128xf32>
    %11 = arith.mulf %10, %9 : vector<16x128xf32>
    %cst_7 = arith.constant 0.707106769 : f32
    %12 = vector.broadcast %cst_7 : f32 to vector<16x128xf32>
    %13 = arith.mulf %9, %12 : vector<16x128xf32>
    %14 = math.erf %13 : vector<16x128xf32>
    %cst_8 = arith.constant 1.000000e+00 : f32
    %15 = vector.broadcast %cst_8 : f32 to vector<16x128xf32>
    %16 = arith.addf %15, %14 : vector<16x128xf32>
    %17 = arith.mulf %11, %16 : vector<16x128xf32>
    %c0_9 = arith.constant 0 : index
    %c0_10 = arith.constant 0 : index
    %18 = vector.load %arg8[%c0_9, %c0_10] : memref<16x32xf32, #tpu.memory_space<vmem>>, vector<16x32xf32>
    %19 = arith.truncf %17 : vector<16x128xf32> to vector<16x128xbf16>
    %c0_11 = arith.constant 0 : index
    %c0_12 = arith.constant 0 : index
    %20 = vector.load %arg5[%c0_11, %c0_12] : memref<128x32xbf16, #tpu.memory_space<vmem>>, vector<128x32xbf16>
    %cst_13 = arith.constant dense<0.000000e+00> : vector<16x32xf32>
    %21 = tpu.matmul %19, %20, %cst_13 {dimension_numbers = #tpu.dot_dimension_numbers<[1], [0], [0], [1], [0, 0, 1, 1], [], []>} : vector<16x128xbf16>, vector<128x32xbf16>, vector<16x32xf32> -> vector<16x32xf32>
    %22 = arith.addf %18, %21 : vector<16x32xf32>
    %c0_14 = arith.constant 0 : index
    %c0_15 = arith.constant 0 : index
    %23 = vector.load %arg8[%c0_14, %c0_15] : memref<16x32xf32, #tpu.memory_space<vmem>>, vector<16x32xf32>
    tpu.vector_store %arg8[%c0_14, %c0_15], %22 {strides = array<i32>} : memref<16x32xf32, #tpu.memory_space<vmem>>, vector<16x32xf32>,
    %c0_i32_16 = arith.constant 0 : i32
    %24 = arith.cmpi eq, %arg1, %c0_i32_16 : i32
    %25 = arith.extui %24 : i1 to i32
    %c0_i32_17 = arith.constant 0 : i32
    %26 = arith.cmpi ne, %25, %c0_i32_17 : i32
    scf.if %26 {
      %c0_18 = arith.constant 0 : index
      %c0_19 = arith.constant 0 : index
      %27 = vector.load %arg8[%c0_18, %c0_19] : memref<16x32xf32, #tpu.memory_space<vmem>>, vector<16x32xf32>
      %c0_20 = arith.constant 0 : index
      %c0_21 = arith.constant 0 : index
      %28 = vector.load %arg6[%c0_20, %c0_21] : memref<1x32xf32, #tpu.memory_space<vmem>>, vector<1x32xf32>
      %29 = vector.broadcast %28 : vector<1x32xf32> to vector<16x32xf32>
      %30 = arith.addf %27, %29 : vector<16x32xf32>
      %c0_22 = arith.constant 0 : index
      %c0_23 = arith.constant 0 : index
      %31 = vector.load %arg7[%c0_22, %c0_23] : memref<16x32xf32, #tpu.memory_space<vmem>>, vector<16x32xf32>
      tpu.vector_store %arg7[%c0_22, %c0_23], %30 {strides = array<i32>} : memref<16x32xf32, #tpu.memory_space<vmem>>, vector<16x32xf32>,
    } else {
    }
    return
  }
  func.func @transform_0(%arg0: i32, %arg1: i32) -> (i32, i32) {
    %c0_i32 = arith.constant 0 : i32
    %c0_i32_0 = arith.constant 0 : i32
    return %arg0, %c0_i32 : i32, i32
  }
  func.func @transform_1(%arg0: i32, %arg1: i32) -> (i32, i32) {
    %c0_i32 = arith.constant 0 : i32
    %c0_i32_0 = arith.constant 0 : i32
    return %c0_i32, %arg1 : i32, i32
  }
  func.func @transform_2(%arg0: i32, %arg1: i32) -> (i32, i32) {
    %c0_i32 = arith.constant 0 : i32
    %c0_i32_0 = arith.constant 0 : i32
    return %c0_i32, %arg1 : i32, i32
  }
  func.func @transform_3(%arg0: i32, %arg1: i32) -> (i32, i32) {
    %c0_i32 = arith.constant 0 : i32
    %c0_i32_0 = arith.constant 0 : i32
    return %arg1, %c0_i32 : i32, i32
  }
  func.func @transform_4(%arg0: i32, %arg1: i32) -> (i32, i32) {
    %c0_i32 = arith.constant 0 : i32
    %c0_i32_0 = arith.constant 0 : i32
    %c0_i32_1 = arith.constant 0 : i32
    return %c0_i32, %c0_i32_0 : i32, i32
  }
  func.func @transform_5(%arg0: i32, %arg1: i32) -> (i32, i32) {
    %c0_i32 = arith.constant 0 : i32
    %c0_i32_0 = arith.constant 0 : i32
    return %arg0, %c0_i32 : i32, i32
  }
}

</mosaic_0001>

<llo_original>
// kernel: tpu_custom_call.1
$region0: #{tpu_custom_call.1}
  #allocation0 [shape = 'u32[]', space=smem, size = 0x4, offset = 0x4, fixed_abs, tag = 'smem constant byte address 0x4 - core index']
  #allocation1 [shape = 'u32[144,128]{1,0:T(1,128)}', space=vmem, size = 0x12000, scoped, tag = 'internal scratch']
  #allocation2 [shape = 'f32[16,32]{1,0:T(8,128)}', space=vmem, size = 0x2000, scoped, tag = 'scratch operand']
  %s0 = inlined_call_operand.vmem [shape: f32[16,32], index: 0, kind: input, shape index: {}]
  %s1 = inlined_call_operand.vmem [shape: bf16[32,128], index: 1, kind: input, shape index: {}]
  %s2 = inlined_call_operand.vmem [shape: f32[1,128], index: 2, kind: input, shape index: {}]
  %s3 = inlined_call_operand.vmem [shape: bf16[128,32], index: 3, kind: input, shape index: {}]
  %s4 = inlined_call_operand.vmem [shape: f32[1,32], index: 4, kind: input, shape index: {}]
  %s5 = inlined_call_operand.hbm [shape: f32[16,32], index: 5, kind: output, shape index: {}]
  %s6 = sld [smem:[#allocation0]]
  $region38: #{tpu_custom_call.1} parent=0
    _
  %s8 = ssub.s32 1, %s6
  %s9 = scalar_select 0, %s8, %s6
  $region1: #{tpu_custom_call.1} parent=0
    #allocation3 [shape = 'u8[8192]{0}', space=vmem, size = 0x2000, scoped, tag = 'output window, operand 0, single buffered']
    #allocation4 [shape = 's32[1]{0}', space=sflag, size = 0x4, scoped, tag = 'scoped memory for tpu_custom_call.1']
    %10 = vsyncpa [#allocation4], 0
    // Predicated region
    $region2: #{tpu_custom_call.1} parent=1 // pred_check
      _
    $region3: #{tpu_custom_call.1} parent=1 // pred_check_branch
      %12 = sbr.rel (0) target = $region5
    $region4: #{tpu_custom_call.1} parent=1 // pred_region
      _
    $region5: #{tpu_custom_call.1} parent=1 // pred_fallthru
      _
    // Predicated region
    $region6: #{tpu_custom_call.1} parent=1 // pred_check
      _
    $region7: #{tpu_custom_call.1} parent=1 // pred_check_branch
      %14 = sbr.rel (0) target = $region9
    $region8: #{tpu_custom_call.1} parent=1 // pred_region
      _
    $region9: #{tpu_custom_call.1} parent=1 // pred_fallthru
      _
    // Predicated region
    $region10: #{tpu_custom_call.1} parent=1 // pred_check
      _
    $region11: #{tpu_custom_call.1} parent=1 // pred_check_branch
      %16 = sbr.rel (0) target = $region13
    $region12: #{tpu_custom_call.1} parent=1 // pred_region
      _
    $region13: #{tpu_custom_call.1} parent=1 // pred_fallthru
      _
    // Predicated region
    $region14: #{tpu_custom_call.1} parent=1 // pred_check
      _
    $region15: #{tpu_custom_call.1} parent=1 // pred_check_branch
      %18 = sbr.rel (0) target = $region17
    $region16: #{tpu_custom_call.1} parent=1 // pred_region
      _
    $region17: #{tpu_custom_call.1} parent=1 // pred_fallthru
      _
    // Predicated region
    $region18: #{tpu_custom_call.1} parent=1 // pred_check
      _
    $region19: #{tpu_custom_call.1} parent=1 // pred_check_branch
      %20 = sbr.rel (0) target = $region21
    $region20: #{tpu_custom_call.1} parent=1 // pred_region
      _
    $region21: #{tpu_custom_call.1} parent=1 // pred_fallthru
      _
    %p22 = scmp.eq.s32.totalorder 0, 0
    // Predicated region
    $region22: #{tpu_custom_call.1} parent=1 // pred_check
      %p23 = pneg %p22
    $region23: #{tpu_custom_call.1} parent=1 // pred_check_branch
      %25 = sbr.rel (%p23) target = $region25
    $region24: #{tpu_custom_call.1} parent=1 // pred_region
      %vm26 = vcmask 261120
      %27 = vst.msk [vmem:[#allocation2] sm:$0xff] %vm26, 0.0
      %28 = vst.msk [vmem:[#allocation2 + $0x8] sm:$0xff] %vm26, 0.0
    $region25: #{tpu_custom_call.1} parent=1 // pred_fallthru
      _
    %v29 = vld [vmem:[%s0] sm:$0xff]
    %v30 = vld [vmem:[%s0 + $0x8] sm:$0xff]
    %v31 = vpack.c.bf16 %v30, %v29
    %v32 = vld [vmem:[%s1] sm:$0xf]
    %v33 = vld [vmem:[%s1 + $0x4] sm:$0xf]
    %v34 = vld [vmem:[%s1 + $0x8] sm:$0xf]
    %v35 = vld [vmem:[%s1 + $0xc] sm:$0xf]
    %v36 = vld [vmem:[%s2] sm:$0x1]
    %v38 = vlaneseq
    %v39 = vshrl.u32 %v38, 7
    %v40 = vsub.s32 0, %v39
    %v41 = vrot.slane %v36, %v40
    %v47 = vunpack.c.l.b16 %v32
    %v48 = vunpack.c.l.b16 %v33
    %v49 = vunpack.c.l.b16 %v34
    %v50 = vunpack.c.l.b16 %v35
    %v51 = vpack.c.b16 %v48, %v47
    %v52 = vpack.c.b16 %v50, %v49
    %vm55 = vcmask 261120
    %v57 = vsel %vm55, %v31, 0
    %59 = vmatprep.subr.bf16.mxu0 0
    %60 = vmatpush1.bf16.msra.mxu0 %v51
    %61 = vmatprep.subr.bf16.mxu0 0
    %62 = vmatpush1.bf16.msra.mxu0 %v52
    %63 = vmatprep.subr.bf16.mxu0 0
    %64 = vmatpush1.bf16.msra.mxu0 0
    %65 = vmatprep.subr.bf16.mxu0 0
    %66 = vmatpush1.bf16.msra.mxu0 0
    %67 = vmatprep.subr.bf16.mxu0 0
    %68 = vmatpush1.bf16.msra.mxu0 0
    %69 = vmatprep.subr.bf16.mxu0 0
    %70 = vmatpush1.bf16.msra.mxu0 0
    %71 = vmatprep.subr.bf16.mxu0 0
    %72 = vmatpush1.bf16.msra.mxu0 0
    %73 = vmatprep.subr.bf16.mxu0 0
    %74 = vmatpush1.bf16.msra.mxu0 0
    %75 = vmatprep.subr.bf16.mxu0 0
    %76 = vmatpush1.bf16.msra.mxu0 0
    %77 = vmatprep.subr.bf16.mxu0 0
    %78 = vmatpush1.bf16.msra.mxu0 0
    %79 = vmatprep.subr.bf16.mxu0 0
    %80 = vmatpush1.bf16.msra.mxu0 0
    %81 = vmatprep.subr.bf16.mxu0 0
    %82 = vmatpush1.bf16.msra.mxu0 0
    %83 = vmatprep.subr.bf16.mxu0 0
    %84 = vmatpush1.bf16.msra.mxu0 0
    %85 = vmatprep.subr.bf16.mxu0 0
    %86 = vmatpush1.bf16.msra.mxu0 0
    %87 = vmatprep.subr.bf16.mxu0 0
    %88 = vmatpush1.bf16.msra.mxu0 0
    %89 = vmatprep.subr.bf16.mxu0 0
    %90 = vmatpush1.bf16.msra.mxu0 0
    %91 = vmatprep.mubr.bf16.mxu0 0
    %92 = vmatmul.mubr.bf16.gmra.mrb[0].mxu0 %v57
    %v93 = vpop.f32.mrb[0].mxu0
    %v94 = vadd.f32 %v41, %v93
    %v95 = vpop.f32.mrb[0].mxu0
    %v96 = vpop.f32.mrb[0].mxu0
    %v97 = vadd.f32 %v41, %v96
    %v98 = vpop.f32.mrb[0].mxu0
    %99 = vdwg.mxu0
    %v100 = vmul.f32 %v94, 0.5
    %v101 = vmul.f32 %v97, 0.5
    %v102 = vmul.f32 %v94, 0.70710677
    %v103 = vmul.f32 %v97, 0.70710677
    %v104 = verf.f32.pop %v102
    %v105 = verf.f32.pop %v103
    %v106 = vadd.f32 %v104, 1.0
    %v107 = vadd.f32 %v105, 1.0
    %v108 = vmul.f32 %v100, %v106
    %v109 = vmul.f32 %v101, %v107
    %v110 = vld [vmem:[#allocation2] sm:$0xff]
    %v111 = vld [vmem:[#allocation2 + $0x8] sm:$0xff]
    %v112 = vpack.c.bf16 %v109, %v108
    %v113 = vld [vmem:[%s3] sm:$0xf]
    %v114 = vld [vmem:[%s3 + $0x4] sm:$0xf]
    %v115 = vld [vmem:[%s3 + $0x8] sm:$0xf]
    %v116 = vld [vmem:[%s3 + $0xc] sm:$0xf]
    %v117 = vld [vmem:[%s3 + $0x10] sm:$0xf]
    %v118 = vld [vmem:[%s3 + $0x14] sm:$0xf]
    %v119 = vld [vmem:[%s3 + $0x18] sm:$0xf]
    %v120 = vld [vmem:[%s3 + $0x1c] sm:$0xf]
    %v121 = vld [vmem:[%s3 + $0x20] sm:$0xf]
    %v122 = vld [vmem:[%s3 + $0x24] sm:$0xf]
    %v123 = vld [vmem:[%s3 + $0x28] sm:$0xf]
    %v124 = vld [vmem:[%s3 + $0x2c] sm:$0xf]
    %v125 = vld [vmem:[%s3 + $0x30] sm:$0xf]
    %v126 = vld [vmem:[%s3 + $0x34] sm:$0xf]
    %v127 = vld [vmem:[%s3 + $0x38] sm:$0xf]
    %v128 = vld [vmem:[%s3 + $0x3c] sm:$0xf]
    %v145 = vunpack.c.l.b16 %v113
    %v146 = vunpack.c.l.b16 %v114
    %v147 = vunpack.c.l.b16 %v115
    %v148 = vunpack.c.l.b16 %v116
    %v149 = vunpack.c.l.b16 %v117
    %v150 = vunpack.c.l.b16 %v118
    %v151 = vunpack.c.l.b16 %v119
    %v152 = vunpack.c.l.b16 %v120
    %v153 = vunpack.c.l.b16 %v121
    %v154 = vunpack.c.l.b16 %v122
    %v155 = vunpack.c.l.b16 %v123
    %v156 = vunpack.c.l.b16 %v124
    %v157 = vunpack.c.l.b16 %v125
    %v158 = vunpack.c.l.b16 %v126
    %v159 = vunpack.c.l.b16 %v127
    %v160 = vunpack.c.l.b16 %v128
    %v161 = vpack.c.b16 %v146, %v145
    %v162 = vpack.c.b16 %v148, %v147
    %v163 = vpack.c.b16 %v150, %v149
    %v164 = vpack.c.b16 %v152, %v151
    %v165 = vpack.c.b16 %v154, %v153
    %v166 = vpack.c.b16 %v156, %v155
    %v167 = vpack.c.b16 %v158, %v157
    %v168 = vpack.c.b16 %v160, %v159
    %177 = vmatprep.subr.bf16.mxu0 0
    %178 = vmatpush1.bf16.msra.mxu0 %v161
    %179 = vmatprep.subr.bf16.mxu0 0
    %180 = vmatpush1.bf16.msra.mxu0 %v162
    %181 = vmatprep.subr.bf16.mxu0 0
    %182 = vmatpush1.bf16.msra.mxu0 %v163
    %183 = vmatprep.subr.bf16.mxu0 0
    %184 = vmatpush1.bf16.msra.mxu0 %v164
    %185 = vmatprep.subr.bf16.mxu0 0
    %186 = vmatpush1.bf16.msra.mxu0 %v165
    %187 = vmatprep.subr.bf16.mxu0 0
    %188 = vmatpush1.bf16.msra.mxu0 %v166
    %189 = vmatprep.subr.bf16.mxu0 0
    %190 = vmatpush1.bf16.msra.mxu0 %v167
    %191 = vmatprep.subr.bf16.mxu0 0
    %192 = vmatpush1.bf16.msra.mxu0 %v168
    %193 = vmatprep.subr.bf16.mxu0 0
    %194 = vmatpush1.bf16.msra.mxu0 0
    %195 = vmatprep.subr.bf16.mxu0 0
    %196 = vmatpush1.bf16.msra.mxu0 0
    %197 = vmatprep.subr.bf16.mxu0 0
    %198 = vmatpush1.bf16.msra.mxu0 0
    %199 = vmatprep.subr.bf16.mxu0 0
    %200 = vmatpush1.bf16.msra.mxu0 0
    %201 = vmatprep.subr.bf16.mxu0 0
    %202 = vmatpush1.bf16.msra.mxu0 0
    %203 = vmatprep.subr.bf16.mxu0 0
    %204 = vmatpush1.bf16.msra.mxu0 0
    %205 = vmatprep.subr.bf16.mxu0 0
    %206 = vmatpush1.bf16.msra.mxu0 0
    %207 = vmatprep.subr.bf16.mxu0 0
    %208 = vmatpush1.bf16.msra.mxu0 0
    %209 = vmatprep.mubr.bf16.mxu0 0
    %210 = vmatmul.mubr.bf16.gmra.mrb[0].mxu0 %v112
    %v211 = vpop.f32.mrb[0].mxu0
    %v212 = vadd.f32 0.0, %v211
    %v213 = vpop.f32.mrb[0].mxu0
    %v214 = vpop.f32.mrb[0].mxu0
    %v215 = vadd.f32 0.0, %v214
    %v216 = vpop.f32.mrb[0].mxu0
    %217 = vdwg.mxu0
    %v218 = vadd.f32 %v110, %v212
    %v219 = vadd.f32 %v111, %v215
    %220 = vst.msk [vmem:[#allocation2] sm:$0xff] %vm55, %v218
    %221 = vst.msk [vmem:[#allocation2 + $0x8] sm:$0xff] %vm55, %v219
    // Predicated region
    $region26: #{tpu_custom_call.1} parent=1 // pred_check
      %p222 = pneg %p22
    $region27: #{tpu_custom_call.1} parent=1 // pred_check_branch
      %224 = sbr.rel (%p222) target = $region29
    $region28: #{tpu_custom_call.1} parent=1 // pred_region
      %v225 = vld [vmem:[#allocation2] sm:$0xff]
      %v226 = vld [vmem:[#allocation2 + $0x8] sm:$0xff]
      %v227 = vld [vmem:[%s4] sm:$0x1]
      %v229 = vlaneseq
      %v230 = vshrl.u32 %v229, 7
      %v231 = vsub.s32 0, %v230
      %v232 = vrot.slane %v227, %v231
      %v234 = vadd.f32 %v225, %v232
      %v235 = vadd.f32 %v226, %v232
      %236 = vst.msk [vmem:[#allocation3] sm:$0xff] %vm55, %v234
      %237 = vst.msk [vmem:[#allocation3 + $0x8] sm:$0xff] %vm55, %v235
    $region29: #{tpu_custom_call.1} parent=1 // pred_fallthru
      _
    // Predicated region
    $region30: #{tpu_custom_call.1} parent=1 // pred_check
      _
    $region31: #{tpu_custom_call.1} parent=1 // pred_check_branch
      %239 = sbr.rel (0) target = $region33
    $region32: #{tpu_custom_call.1} parent=1 // pred_region
      %s241 = ssub.s32 256, 256
      %242 = vsyncadd [#allocation4], %s241
      %s243 = sshll.u32 [#allocation3], 4
      %s244 = int_to_ptr.vmem [resolvable:$true] %s243
      %249 = dma.vmem_to_hbm [thread:$0]  %s244, 256, %s5, [#allocation4], 128, 128, 8
    $region33: #{tpu_custom_call.1} parent=1 // pred_fallthru
      _
    // Predicated region
    $region34: #{tpu_custom_call.1} parent=1 // pred_check
      _
    $region35: #{tpu_custom_call.1} parent=1 // pred_check_branch
      %251 = sbr.rel (0) target = $region37
    $region36: #{tpu_custom_call.1} parent=1 // pred_region
      %252 = dma.done [#allocation4], 256
    $region37: #{tpu_custom_call.1} parent=1 // pred_fallthru
      _
    %253 = vsyncpa [#allocation4], 1

</llo_original>
